<compile_context>
chip_gen: v7x
topology: tpu7x:2x2x1
jax: 0.10.0
libtpu: 0.0.40
codegen_flags: <defaults>
</compile_context>

<pallas_src>
import functools

import jax
import jax.numpy as jnp
import numpy as np
from jax.experimental import pallas as pl
from jax.experimental.pallas import tpu as pltpu

# ----------------------------------------------------------------------------
# Irreps configuration
# ----------------------------------------------------------------------------
N_SCALARS = 8                      # dim of scalar block (mul=8, l=0)
N_GATES = 8                        # dim of gate block   (mul=8, l=0)
RS_NONSCALARS = [(4, 1), (4, 2)]   # (mul, l) — 4x l=1 + 4x l=2
N_NONSCALARS = sum(mul * (2 * l + 1) for mul, l in RS_NONSCALARS)  # 32
C_IN = N_SCALARS + N_GATES + N_NONSCALARS                          # 48
C_OUT = N_SCALARS + N_NONSCALARS                                   # 40


# Gate-expansion matrix G[k, j] = 1 if nonscalar column j is gated by gate k
# (numpy version, used only by the pure-JAX reference).
def _build_gate_expansion_np():
    gate_idx = []
    k = 0
    for mul, l in RS_NONSCALARS:
        for _ in range(mul):
            gate_idx.extend([k] * (2 * l + 1))
            k += 1
    assert k == N_GATES and len(gate_idx) == N_NONSCALARS
    G = np.zeros((N_GATES, N_NONSCALARS), dtype=np.float32)
    for j, gk in enumerate(gate_idx):
        G[gk, j] = 1.0
    return jnp.asarray(G)


# normalize2mom constants (deterministic Monte-Carlo, matches e3nn_little).
def _normalize2mom_const(act):
    z = jax.random.normal(jax.random.PRNGKey(1), (1_000_000,), dtype=jnp.float32)
    return float(1.0 / jnp.sqrt(jnp.mean(act(z) ** 2)))


# ----------------------------------------------------------------------------
# Pallas kernel
# ----------------------------------------------------------------------------
def gated_block_kernel(x_ref, o_ref, *, c_scalar, c_gate):
    x = x_ref[...].astype(jnp.float32)                     # [TM, 48]

    # Single EUP pass over the 16 l=0 channels (scalars + gates), then split.
    sig = jax.nn.sigmoid(x[:, :N_SCALARS + N_GATES])       # [TM, 16]
    scal_act = c_scalar * (x[:, :N_SCALARS] * sig[:, :N_SCALARS])       # swish
    gate_act = c_gate * sig[:, N_SCALARS:N_SCALARS + N_GATES]           # sigmoid

    # Build the 0/1 gate-expansion matrix G[8, 32] in-register (no constant
    # input, no per-step DMA): column j of the nonscalar block is gated by
    # gate gidx[j].  One vreg of iota/compare work per grid step.
    row = jax.lax.broadcasted_iota(jnp.int32, (N_GATES, N_NONSCALARS), 0)
    col = jax.lax.broadcasted_iota(jnp.int32, (N_GATES, N_NONSCALARS), 1)
    gidx = jnp.zeros((N_GATES, N_NONSCALARS), jnp.int32)
    c0 = 0
    k = 0
    for mul, l in RS_NONSCALARS:
        w = 2 * l + 1
        for _ in range(mul):
            gidx = jnp.where((col >= c0) & (col < c0 + w), k, gidx)
            c0 += w
            k += 1
    G = (row == gidx).astype(jnp.float32)                  # [8, 32] one-hot

    # ElementwiseTensorProduct(Rs_nonscalars, Rs_gates): broadcast each gate
    # scalar over its (2l+1)-dim irrep via the expansion matmul (MXU; fully
    # hidden under the HBM DMA for these tile sizes).
    gate_cols = jnp.dot(gate_act, G, preferred_element_type=jnp.float32)  # [TM, 32]
    gated = x[:, N_SCALARS + N_GATES:] * gate_cols

    # Direct slice stores (no concatenate / extra [TM, 40] temporary).
    o_ref[:, :N_SCALARS] = scal_act.astype(o_ref.dtype)
    o_ref[:, N_SCALARS:] = gated.astype(o_ref.dtype)


def _choose_tm(n_rows, *, tm_max=4096, min_steps=4):
    # Big tiles to amortize the ~0.35 us per-grid-step overhead, but keep at
    # least `min_steps` grid steps so the "parallel" axis can be sharded
    # across both v7x TensorCores.  tm must be a multiple of 8 (sublanes).
    tm = -(-n_rows // min_steps)        # ceil(n / min_steps)
    tm = min(tm, tm_max)
    tm = max(8, -(-tm // 8) * 8)        # round up to a multiple of 8
    return tm


def gated_block_parity(features, c_scalar, c_gate, *, tm=None):
    N, C = features.shape
    assert C == C_IN
    if tm is None:
        tm = _choose_tm(N)
    kernel = functools.partial(gated_block_kernel, c_scalar=c_scalar, c_gate=c_gate)
    return pl.pallas_call(
        kernel,
        out_shape=jax.ShapeDtypeStruct((N, C_OUT), features.dtype),
        grid_spec=pltpu.PrefetchScalarGridSpec(
            num_scalar_prefetch=0,
            grid=(pl.cdiv(N, tm),),       # partial last tile handled by Pallas
            in_specs=[pl.BlockSpec((tm, C_IN), lambda i: (i, 0))],
            out_specs=pl.BlockSpec((tm, C_OUT), lambda i: (i, 0)),
        ),
        compiler_params=pltpu.CompilerParams(
            dimension_semantics=("parallel",),
        ),
    )(features)


# ----------------------------------------------------------------------------
# Pure-JAX reference (mirrors the PyTorch forward)
# ----------------------------------------------------------------------------
def reference(features, G, c_scalar, c_gate):
    scal = features[:, :N_SCALARS]
    gate = features[:, N_SCALARS:N_SCALARS + N_GATES]
    nons = features[:, N_SCALARS + N_GATES:]
    scal = c_scalar * (scal * jax.nn.sigmoid(scal))
    gate = c_gate * jax.nn.sigmoid(gate)
    gated = nons * (gate @ G)
    return jnp.concatenate([scal, gated], axis=-1)


if __name__ == "__main__":
    c_scalar = _normalize2mom_const(lambda z: z * jax.nn.sigmoid(z))   # swish
    c_gate = _normalize2mom_const(jax.nn.sigmoid)

    # Small batch, deliberately NOT a multiple of the tile size, to exercise
    # the pl.cdiv / partial-last-tile path.
    N = 200
    key = jax.random.PRNGKey(0)
    features = jax.random.normal(key, (N, C_IN), dtype=jnp.float32)

    out = gated_block_parity(features, c_scalar, c_gate)
    out = jax.block_until_ready(out)

    G = _build_gate_expansion_np()
    ref = reference(features, G, c_scalar, c_gate)
    assert out.shape == (N, C_OUT)
    np.testing.assert_allclose(np.asarray(out), np.asarray(ref), rtol=1e-5, atol=1e-5)

    print("KERNEL_OK")
</pallas_src>

<mosaic_0001>
module attributes {stable_mosaic.version = 11 : i64} {
  func.func @gated_block_kernel(%arg0: i32, %arg1: memref<56x48xf32, #tpu.memory_space<vmem>>, %arg2: memref<56x40xf32, #tpu.memory_space<vmem>>) attributes {dimension_semantics = [#tpu.dimension_semantics<parallel>], iteration_bounds = array<i64: 4>, scalar_prefetch = 0 : i64, scratch_operands = 0 : i64, tpu.core_type = #tpu.core_type<tc>, window_params = [{transform_indices = @transform_0, window_bounds = array<i64: 56, 48>}, {transform_indices = @transform_1, window_bounds = array<i64: 56, 40>}]} {
    %c0 = arith.constant 0 : index
    %c0_0 = arith.constant 0 : index
    %0 = vector.load %arg1[%c0, %c0_0] : memref<56x48xf32, #tpu.memory_space<vmem>>, vector<56x48xf32>
    %1 = vector.extract_strided_slice %0 {offsets = [0, 0], sizes = [56, 16], strides = [1, 1]} : vector<56x48xf32> to vector<56x16xf32>
    %2 = arith.negf %1 : vector<56x16xf32>
    %3 = math.exp %2 : vector<56x16xf32>
    %cst = arith.constant 1.000000e+00 : f32
    %4 = vector.broadcast %cst : f32 to vector<56x16xf32>
    %5 = arith.addf %4, %3 : vector<56x16xf32>
    %6 = arith.divf %4, %5 : vector<56x16xf32>
    %7 = vector.extract_strided_slice %0 {offsets = [0, 0], sizes = [56, 8], strides = [1, 1]} : vector<56x48xf32> to vector<56x8xf32>
    %8 = vector.extract_strided_slice %6 {offsets = [0, 0], sizes = [56, 8], strides = [1, 1]} : vector<56x16xf32> to vector<56x8xf32>
    %9 = arith.mulf %7, %8 : vector<56x8xf32>
    %cst_1 = arith.constant 1.6766355 : f32
    %10 = vector.broadcast %cst_1 : f32 to vector<56x8xf32>
    %11 = arith.mulf %10, %9 : vector<56x8xf32>
    %12 = vector.extract_strided_slice %6 {offsets = [0, 8], sizes = [56, 8], strides = [1, 1]} : vector<56x16xf32> to vector<56x8xf32>
    %cst_2 = arith.constant 1.84582412 : f32
    %13 = vector.broadcast %cst_2 : f32 to vector<56x8xf32>
    %14 = arith.mulf %13, %12 : vector<56x8xf32>
    %15 = tpu.iota {dimensions = array<i32: 0>} : vector<8x32xi32>
    %16 = tpu.iota {dimensions = array<i32: 1>} : vector<8x32xi32>
    %c0_i32 = arith.constant 0 : i32
    %17 = vector.broadcast %c0_i32 : i32 to vector<8x32xi32>
    %c0_i32_3 = arith.constant 0 : i32
    %18 = vector.broadcast %c0_i32_3 : i32 to vector<8x32xi32>
    %19 = arith.cmpi sge, %16, %18 : vector<8x32xi32>
    %c3_i32 = arith.constant 3 : i32
    %20 = vector.broadcast %c3_i32 : i32 to vector<8x32xi32>
    %21 = arith.cmpi slt, %16, %20 : vector<8x32xi32>
    %22 = arith.andi %19, %21 : vector<8x32xi1>
    %c0_i32_4 = arith.constant 0 : i32
    %23 = vector.broadcast %c0_i32_4 : i32 to vector<8x32xi32>
    %24 = arith.select %22, %23, %17 : vector<8x32xi1>, vector<8x32xi32>
    %c3_i32_5 = arith.constant 3 : i32
    %25 = vector.broadcast %c3_i32_5 : i32 to vector<8x32xi32>
    %26 = arith.cmpi sge, %16, %25 : vector<8x32xi32>
    %c6_i32 = arith.constant 6 : i32
    %27 = vector.broadcast %c6_i32 : i32 to vector<8x32xi32>
    %28 = arith.cmpi slt, %16, %27 : vector<8x32xi32>
    %29 = arith.andi %26, %28 : vector<8x32xi1>
    %c1_i32 = arith.constant 1 : i32
    %30 = vector.broadcast %c1_i32 : i32 to vector<8x32xi32>
    %31 = arith.select %29, %30, %24 : vector<8x32xi1>, vector<8x32xi32>
    %c6_i32_6 = arith.constant 6 : i32
    %32 = vector.broadcast %c6_i32_6 : i32 to vector<8x32xi32>
    %33 = arith.cmpi sge, %16, %32 : vector<8x32xi32>
    %c9_i32 = arith.constant 9 : i32
    %34 = vector.broadcast %c9_i32 : i32 to vector<8x32xi32>
    %35 = arith.cmpi slt, %16, %34 : vector<8x32xi32>
    %36 = arith.andi %33, %35 : vector<8x32xi1>
    %c2_i32 = arith.constant 2 : i32
    %37 = vector.broadcast %c2_i32 : i32 to vector<8x32xi32>
    %38 = arith.select %36, %37, %31 : vector<8x32xi1>, vector<8x32xi32>
    %c9_i32_7 = arith.constant 9 : i32
    %39 = vector.broadcast %c9_i32_7 : i32 to vector<8x32xi32>
    %40 = arith.cmpi sge, %16, %39 : vector<8x32xi32>
    %c12_i32 = arith.constant 12 : i32
    %41 = vector.broadcast %c12_i32 : i32 to vector<8x32xi32>
    %42 = arith.cmpi slt, %16, %41 : vector<8x32xi32>
    %43 = arith.andi %40, %42 : vector<8x32xi1>
    %c3_i32_8 = arith.constant 3 : i32
    %44 = vector.broadcast %c3_i32_8 : i32 to vector<8x32xi32>
    %45 = arith.select %43, %44, %38 : vector<8x32xi1>, vector<8x32xi32>
    %c12_i32_9 = arith.constant 12 : i32
    %46 = vector.broadcast %c12_i32_9 : i32 to vector<8x32xi32>
    %47 = arith.cmpi sge, %16, %46 : vector<8x32xi32>
    %c17_i32 = arith.constant 17 : i32
    %48 = vector.broadcast %c17_i32 : i32 to vector<8x32xi32>
    %49 = arith.cmpi slt, %16, %48 : vector<8x32xi32>
    %50 = arith.andi %47, %49 : vector<8x32xi1>
    %c4_i32 = arith.constant 4 : i32
    %51 = vector.broadcast %c4_i32 : i32 to vector<8x32xi32>
    %52 = arith.select %50, %51, %45 : vector<8x32xi1>, vector<8x32xi32>
    %c17_i32_10 = arith.constant 17 : i32
    %53 = vector.broadcast %c17_i32_10 : i32 to vector<8x32xi32>
    %54 = arith.cmpi sge, %16, %53 : vector<8x32xi32>
    %c22_i32 = arith.constant 22 : i32
    %55 = vector.broadcast %c22_i32 : i32 to vector<8x32xi32>
    %56 = arith.cmpi slt, %16, %55 : vector<8x32xi32>
    %57 = arith.andi %54, %56 : vector<8x32xi1>
    %c5_i32 = arith.constant 5 : i32
    %58 = vector.broadcast %c5_i32 : i32 to vector<8x32xi32>
    %59 = arith.select %57, %58, %52 : vector<8x32xi1>, vector<8x32xi32>
    %c22_i32_11 = arith.constant 22 : i32
    %60 = vector.broadcast %c22_i32_11 : i32 to vector<8x32xi32>
    %61 = arith.cmpi sge, %16, %60 : vector<8x32xi32>
    %c27_i32 = arith.constant 27 : i32
    %62 = vector.broadcast %c27_i32 : i32 to vector<8x32xi32>
    %63 = arith.cmpi slt, %16, %62 : vector<8x32xi32>
    %64 = arith.andi %61, %63 : vector<8x32xi1>
    %c6_i32_12 = arith.constant 6 : i32
    %65 = vector.broadcast %c6_i32_12 : i32 to vector<8x32xi32>
    %66 = arith.select %64, %65, %59 : vector<8x32xi1>, vector<8x32xi32>
    %c27_i32_13 = arith.constant 27 : i32
    %67 = vector.broadcast %c27_i32_13 : i32 to vector<8x32xi32>
    %68 = arith.cmpi sge, %16, %67 : vector<8x32xi32>
    %c32_i32 = arith.constant 32 : i32
    %69 = vector.broadcast %c32_i32 : i32 to vector<8x32xi32>
    %70 = arith.cmpi slt, %16, %69 : vector<8x32xi32>
    %71 = arith.andi %68, %70 : vector<8x32xi1>
    %c7_i32 = arith.constant 7 : i32
    %72 = vector.broadcast %c7_i32 : i32 to vector<8x32xi32>
    %73 = arith.select %71, %72, %66 : vector<8x32xi1>, vector<8x32xi32>
    %74 = arith.cmpi eq, %15, %73 : vector<8x32xi32>
    %75 = arith.extui %74 : vector<8x32xi1> to vector<8x32xi32>
    %76 = arith.sitofp %75 : vector<8x32xi32> to vector<8x32xf32>
    %cst_14 = arith.constant dense<0.000000e+00> : vector<56x32xf32>
    %77 = tpu.matmul %14, %76, %cst_14 {dimension_numbers = #tpu.dot_dimension_numbers<[1], [0], [0], [1], [0, 0, 1, 1], [], []>} : vector<56x8xf32>, vector<8x32xf32>, vector<56x32xf32> -> vector<56x32xf32>
    %78 = vector.extract_strided_slice %0 {offsets = [0, 16], sizes = [56, 32], strides = [1, 1]} : vector<56x48xf32> to vector<56x32xf32>
    %79 = arith.mulf %78, %77 : vector<56x32xf32>
    %c0_15 = arith.constant 0 : index
    %c0_16 = arith.constant 0 : index
    %80 = vector.load %arg2[%c0_15, %c0_16] : memref<56x40xf32, #tpu.memory_space<vmem>>, vector<56x8xf32>
    tpu.vector_store %arg2[%c0_15, %c0_16], %11 {strides = array<i32>} : memref<56x40xf32, #tpu.memory_space<vmem>>, vector<56x8xf32>,
    %c0_17 = arith.constant 0 : index
    %c8 = arith.constant 8 : index
    %81 = vector.load %arg2[%c0_17, %c8] : memref<56x40xf32, #tpu.memory_space<vmem>>, vector<56x32xf32>
    tpu.vector_store %arg2[%c0_17, %c8], %79 {strides = array<i32>} : memref<56x40xf32, #tpu.memory_space<vmem>>, vector<56x32xf32>,
    return
  }
  func.func @transform_0(%arg0: i32) -> (i32, i32) {
    %c0_i32 = arith.constant 0 : i32
    %c0_i32_0 = arith.constant 0 : i32
    return %arg0, %c0_i32 : i32, i32
  }
  func.func @transform_1(%arg0: i32) -> (i32, i32) {
    %c0_i32 = arith.constant 0 : i32
    %c0_i32_0 = arith.constant 0 : i32
    return %arg0, %c0_i32 : i32, i32
  }
}

</mosaic_0001>

<llo_original>
// kernel: tpu_custom_call.1
$region0: #{tpu_custom_call.1}
  #allocation0 [shape = 'u32[]', space=smem, size = 0x4, offset = 0x4, fixed_abs, tag = 'smem constant byte address 0x4 - core index']
  #allocation1 [shape = 'u32[144,128]{1,0:T(1,128)}', space=vmem, size = 0x12000, scoped, tag = 'internal scratch']
  %s0 = inlined_call_operand.vmem [shape: f32[200,48], index: 0, kind: input, shape index: {}]
  %s1 = inlined_call_operand.vmem [shape: f32[200,40], index: 1, kind: output, shape index: {}]
  %s2 = sld [smem:[#allocation0]]
  $region85: #{tpu_custom_call.1} parent=0
    _
  %s4 = ssub.s32 1, %s2
  %s5 = scalar_select 0, %s4, %s2
  $region1: #{tpu_custom_call.1} parent=0
    #allocation2 [shape = 'u8[57344]{0}', space=vmem, size = 0xe000, scoped, tag = 'output window, operand 0']
    loop: start=0, step=1, limit=6
    $region2: #{tpu_custom_call.1} parent=1 // loop_pre_header
      _
    $region3: #{tpu_custom_call.1} parent=1 // loop_header
      %s7 = sphi 0, %s11
      %p8 = scmp.ge.s32.totalorder %s7, 6
      %s17 = sphi 0, %s19
      %s20 = sphi 0, %s17
      %s21 = sphi 0, %s20
      %s37 = sphi 0, %s21
      %s43 = sphi 0, %s45
      %s46 = sphi 0, %s43
      %s47 = sphi 0, %s46
      %s63 = sphi 0, %s47
    $region4: #{tpu_custom_call.1} parent=1 // loop_header_branch
      %10 = sbr.rel (%p8) target = $region8
    $region5: #{tpu_custom_call.1} parent=1 // loop_body
      %s12 = ssub.s32 %s7, 1
      %s13 = ssub.s32 %s7, 2
      %s14 = sadd.s32 %s7, 1
      %s15 = ssub.s32 %s7, %s14
      %p16 = scmp.eq.s32.totalorder %s15, 0
      %s18 = sadd.s32 %s17, 1
      %s19 = scalar_select %p16, %s17, %s18
      %p22 = pneg %p16
      %p23 = scmp.eq.s32.totalorder %s7, 3
      %p24 = por %p22, %p23
      %p25 = scmp.ne.s32.totalorder %s17, %s20
      %p26 = scmp.eq.s32.totalorder %s7, 0
      %p27 = por %p25, %p26
      %p28 = scmp.ne.s32.totalorder %s17, %s20
      %p29 = scmp.eq.s32.totalorder %s12, 3
      %p30 = por %p28, %p29
      %p31 = scmp.ne.s32.totalorder %s20, %s21
      %p32 = scmp.eq.s32.totalorder %s12, 0
      %p33 = por %p31, %p32
      %p34 = scmp.ne.s32.totalorder %s20, %s21
      %p35 = scmp.eq.s32.totalorder %s13, 3
      %p36 = por %p34, %p35
      %p38 = scmp.ne.s32.totalorder %s21, %s37
      %p39 = scmp.eq.s32.totalorder %s13, 0
      %p40 = por %p38, %p39
      %s41 = ssub.s32 %s7, %s14
      %p42 = scmp.eq.s32.totalorder %s41, 0
      %s44 = sadd.s32 %s43, 1
      %s45 = scalar_select %p42, %s43, %s44
      %p48 = pneg %p42
      %p49 = scmp.eq.s32.totalorder %s7, 3
      %p50 = por %p48, %p49
      %p51 = scmp.ne.s32.totalorder %s43, %s46
      %p52 = scmp.eq.s32.totalorder %s7, 0
      %p53 = por %p51, %p52
      %p54 = scmp.ne.s32.totalorder %s43, %s46
      %p55 = scmp.eq.s32.totalorder %s12, 3
      %p56 = por %p54, %p55
      %p57 = scmp.ne.s32.totalorder %s46, %s47
      %p58 = scmp.eq.s32.totalorder %s12, 0
      %p59 = por %p57, %p58
      %p60 = scmp.ne.s32.totalorder %s46, %s47
      %p61 = scmp.eq.s32.totalorder %s13, 3
      %p62 = por %p60, %p61
      %p64 = scmp.ne.s32.totalorder %s47, %s63
      %p65 = scmp.eq.s32.totalorder %s13, 0
      %p66 = por %p64, %p65
      %p67 = scmp.le.s32.totalorder 1, %s7
      %p68 = scmp.lt.s32.totalorder %s7, 5
      %p69 = pnand %p67, %p68
      %p70 = pneg %p69
      // Predicated region
      $region9: #{tpu_custom_call.1} parent=5 // pred_check
        _
      $region10: #{tpu_custom_call.1} parent=5 // pred_check_branch
        %72 = sbr.rel (%p69) target = $region12
      $region11: #{tpu_custom_call.1} parent=5 // pred_region
        %s73 = ssub.s32 %s7, 1
      $region12: #{tpu_custom_call.1} parent=5 // pred_fallthru
        _
      %p74 = scmp.lt.s32.totalorder %s7, 4
      // Predicated region
      $region13: #{tpu_custom_call.1} parent=5 // pred_check
        %p75 = pneg %p74
      $region14: #{tpu_custom_call.1} parent=5 // pred_check_branch
        %77 = sbr.rel (%p75) target = $region16
      $region15: #{tpu_custom_call.1} parent=5 // pred_region
        // Predicated region
        $region17: #{tpu_custom_call.1} parent=15 // pred_check
          %p78 = pneg %p27
        $region18: #{tpu_custom_call.1} parent=15 // pred_check_branch
          %80 = sbr.rel (%p78) target = $region20
        $region19: #{tpu_custom_call.1} parent=15 // pred_region
          %s81 = smul.u32 7, %s7
          %s82 = ssub.s32 25, %s81
          %p83 = scmp.lt.s32.totalorder %s82, 7
          %s84 = scalar_select %p83, %s82, 7
          %s85 = smul.u32 128, %s84
          %p86 = scmp.lt.s32.totalorder %s81, 24
          %s87 = scalar_select %p86, %s81, 24
          %s88 = smul.addr %s87, 8
          %s89 = scalar_lea.vmem %s0, %s88
          %s90 = smul.u32 7, %s7
          %s91 = ssub.s32 25, %s90
          %p92 = scmp.lt.s32.totalorder %s91, 7
          %s93 = scalar_select %p92, %s91, 7
          %s94 = smul.u32 128, %s93
        $region20: #{tpu_custom_call.1} parent=15 // pred_fallthru
          _
      $region16: #{tpu_custom_call.1} parent=5 // pred_fallthru
        _
      %p95 = scmp.le.s32.totalorder 1, %s7
      %p96 = scmp.lt.s32.totalorder %s7, 5
      %p97 = pnand %p95, %p96
      %p98 = pneg %p97
      // Predicated region
      $region21: #{tpu_custom_call.1} parent=5 // pred_check
        _
      $region22: #{tpu_custom_call.1} parent=5 // pred_check_branch
        %100 = sbr.rel (%p97) target = $region24
      $region23: #{tpu_custom_call.1} parent=5 // pred_region
        %s101 = ssub.s32 %s7, 1
        %s102 = smul.u32 7, %s12
        %s103 = ssub.s32 25, %s102
        %p104 = scmp.lt.s32.totalorder %s103, 7
        %s105 = scalar_select %p104, %s103, 7
        %s106 = smul.u32 128, %s105
        %p107 = scmp.lt.s32.totalorder %s102, 24
        %s108 = scalar_select %p107, %s102, 24
        %s109 = smul.addr %s108, 8
        %s110 = scalar_lea.vmem %s0, %s109
        %p111 = pneg %p33
        %p112 = pneg %p30
        %p113 = pneg %p59
        %p114 = pneg %p56
        %s115 = sand.u32 %s46, 1
        %s116 = sand.u32 %s46, 1
        %s117 = smul.addr %s116, 56
        %s118 = scalar_lea.vmem [#allocation2], %s117
        %s119 = smul.u32 7, %s12
        %s120 = ssub.s32 25, %s119
        %p121 = scmp.lt.s32.totalorder %s120, 7
        %s122 = scalar_select %p121, %s120, 7
        %s123 = smul.u32 128, %s122
        %p124 = scmp.lt.s32.totalorder %s119, 24
        %s125 = scalar_select %p124, %s119, 24
        %s126 = smul.addr %s125, 8
        %s127 = scalar_lea.vmem %s0, %s126
        %s128 = smul.u32 7, %s12
        %s129 = ssub.s32 25, %s128
        %p130 = scmp.lt.s32.totalorder %s129, 7
        %s131 = scalar_select %p130, %s129, 7
        %s132 = smul.u32 128, %s131
        %s133 = smul.u32 7, %s12
        %s134 = ssub.s32 25, %s133
        %p135 = scmp.lt.s32.totalorder %s134, 7
        %s136 = scalar_select %p135, %s134, 7
        %s137 = smul.u32 128, %s136
        %v138 = vld [vmem:[%s127] sm:$0xff]
        %v139 = vld [vmem:[%s127 + $0x8] sm:$0xff]
        %v140 = vld [vmem:[%s127 + $0x10] sm:$0xff]
        %v141 = vld [vmem:[%s127 + $0x18] sm:$0xff]
        %v142 = vld [vmem:[%s127 + $0x20] sm:$0xff]
        %v143 = vld [vmem:[%s127 + $0x28] sm:$0xff]
        %v144 = vld [vmem:[%s127 + $0x30] sm:$0xff]
        %v145 = vxor.u32 %v138, 2147483648
        %v146 = vxor.u32 %v139, 2147483648
        %v147 = vxor.u32 %v140, 2147483648
        %v148 = vxor.u32 %v141, 2147483648
        %v149 = vxor.u32 %v142, 2147483648
        %v150 = vxor.u32 %v143, 2147483648
        %v151 = vxor.u32 %v144, 2147483648
        %v152 = vmul.f32 %v145, 1.442695
        %v153 = vpow.pop %v152
        %v154 = vmul.f32 %v146, 1.442695
        %v155 = vpow.pop %v154
        %v156 = vmul.f32 %v147, 1.442695
        %v157 = vpow.pop %v156
        %v158 = vmul.f32 %v148, 1.442695
        %v159 = vpow.pop %v158
        %v160 = vmul.f32 %v149, 1.442695
        %v161 = vpow.pop %v160
        %v162 = vmul.f32 %v150, 1.442695
        %v163 = vpow.pop %v162
        %v164 = vmul.f32 %v151, 1.442695
        %v165 = vpow.pop %v164
        %v166 = vadd.f32 %v153, 1.0
        %v167 = vadd.f32 %v155, 1.0
        %v168 = vadd.f32 %v157, 1.0
        %v169 = vadd.f32 %v159, 1.0
        %v170 = vadd.f32 %v161, 1.0
        %v171 = vadd.f32 %v163, 1.0
        %v172 = vadd.f32 %v165, 1.0
        %v173 = vrcp.pop %v166
        %v174 = vmul.f32 1.0, %v173
        %v175 = vrcp.pop %v167
        %v176 = vmul.f32 1.0, %v175
        %v177 = vrcp.pop %v168
        %v178 = vmul.f32 1.0, %v177
        %v179 = vrcp.pop %v169
        %v180 = vmul.f32 1.0, %v179
        %v181 = vrcp.pop %v170
        %v182 = vmul.f32 1.0, %v181
        %v183 = vrcp.pop %v171
        %v184 = vmul.f32 1.0, %v183
        %v185 = vrcp.pop %v172
        %v186 = vmul.f32 1.0, %v185
        %v187 = vmul.f32 %v138, %v174
        %v188 = vmul.f32 %v139, %v176
        %v189 = vmul.f32 %v140, %v178
        %v190 = vmul.f32 %v141, %v180
        %v191 = vmul.f32 %v142, %v182
        %v192 = vmul.f32 %v143, %v184
        %v193 = vmul.f32 %v144, %v186
        %v194 = vmul.f32 %v187, 1.6766355
        %v195 = vmul.f32 %v188, 1.6766355
        %v196 = vmul.f32 %v189, 1.6766355
        %v197 = vmul.f32 %v190, 1.6766355
        %v198 = vmul.f32 %v191, 1.6766355
        %v199 = vmul.f32 %v192, 1.6766355
        %v200 = vmul.f32 %v193, 1.6766355
        %v201 = vmul.f32 %v174, 1.8458241
        %v202 = vmul.f32 %v176, 1.8458241
        %v203 = vmul.f32 %v178, 1.8458241
        %v204 = vmul.f32 %v180, 1.8458241
        %v205 = vmul.f32 %v182, 1.8458241
        %v206 = vmul.f32 %v184, 1.8458241
        %v207 = vmul.f32 %v186, 1.8458241
        %v208 = vlaneseq
        %v209 = vshrl.u32 %v208, 7
        %v210 = vlaneseq
        %v211 = vand.u32 %v210, 127
        %vm212 = vcmp.ge.s32.totalorder %v211, 3
        %vm213 = vcmp.lt.s32.totalorder %v211, 6
        %vm214 = vmand %vm212, %vm213
        %v215 = vsel %vm214, 1, 0
        %vm216 = vcmp.ge.s32.totalorder %v211, 6
        %vm217 = vcmp.lt.s32.totalorder %v211, 9
        %vm218 = vmand %vm216, %vm217
        %v219 = vsel %vm218, 2, %v215
        %vm220 = vcmp.ge.s32.totalorder %v211, 9
        %vm221 = vcmp.lt.s32.totalorder %v211, 12
        %vm222 = vmand %vm220, %vm221
        %v223 = vsel %vm222, 3, %v219
        %vm224 = vcmp.ge.s32.totalorder %v211, 12
        %vm225 = vcmp.lt.s32.totalorder %v211, 17
        %vm226 = vmand %vm224, %vm225
        %v227 = vsel %vm226, 4, %v223
        %vm228 = vcmp.ge.s32.totalorder %v211, 17
        %vm229 = vcmp.lt.s32.totalorder %v211, 22
        %vm230 = vmand %vm228, %vm229
        %v231 = vsel %vm230, 5, %v227
        %vm232 = vcmp.ge.s32.totalorder %v211, 22
        %vm233 = vcmp.lt.s32.totalorder %v211, 27
        %vm234 = vmand %vm232, %vm233
        %v235 = vsel %vm234, 6, %v231
        %vm236 = vcmp.ge.s32.totalorder %v211, 27
        %vm237 = vcmp.lt.s32.totalorder %v211, 32
        %vm238 = vmand %vm236, %vm237
        %v239 = vsel %vm238, 7, %v235
        %vm240 = vcmp.eq.s32.totalorder %v209, %v239
        %v241 = vsel %vm240, 1, 0
        %v242 = vcvt.s32.f32 %v241
        %250 = vrot.lane.b32.xlu0 %v201, 120
        %v251 = vpop.permute.xlu0 %250
        %252 = vrot.lane.b32.xlu0 %v202, 120
        %v253 = vpop.permute.xlu0 %252
        %254 = vrot.lane.b32.xlu0 %v203, 120
        %v255 = vpop.permute.xlu0 %254
        %256 = vrot.lane.b32.xlu0 %v204, 120
        %v257 = vpop.permute.xlu0 %256
        %258 = vrot.lane.b32.xlu0 %v205, 120
        %v259 = vpop.permute.xlu0 %258
        %260 = vrot.lane.b32.xlu0 %v206, 120
        %v261 = vpop.permute.xlu0 %260
        %262 = vrot.lane.b32.xlu0 %v207, 120
        %v263 = vpop.permute.xlu0 %262
        %vm264 = vcmask 64512
        %v265 = vsel %vm264, %v251, 0
        %v267 = vsel %vm264, %v253, 0
        %v269 = vsel %vm264, %v255, 0
        %v271 = vsel %vm264, %v257, 0
        %v273 = vsel %vm264, %v259, 0
        %v275 = vsel %vm264, %v261, 0
        %v277 = vsel %vm264, %v263, 0
        %279 = vmatprep.subr.mxu0 0.0
        %280 = vmatpush1.msra.mxu0 %v242
        %281 = vmatprep.subr.mxu0 0.0
        %282 = vmatpush1.msra.mxu0 0.0
        %283 = vmatprep.subr.mxu0 0.0
        %284 = vmatpush1.msra.mxu0 0.0
        %285 = vmatprep.subr.mxu0 0.0
        %286 = vmatpush1.msra.mxu0 0.0
        %287 = vmatprep.subr.mxu0 0.0
        %288 = vmatpush1.msra.mxu0 0.0
        %289 = vmatprep.subr.mxu0 0.0
        %290 = vmatpush1.msra.mxu0 0.0
        %291 = vmatprep.subr.mxu0 0.0
        %292 = vmatpush1.msra.mxu0 0.0
        %293 = vmatprep.subr.mxu0 0.0
        %294 = vmatpush1.msra.mxu0 0.0
        %295 = vmatprep.subr.mxu0 0.0
        %296 = vmatpush1.msra.mxu0 0.0
        %297 = vmatprep.subr.mxu0 0.0
        %298 = vmatpush1.msra.mxu0 0.0
        %299 = vmatprep.subr.mxu0 0.0
        %300 = vmatpush1.msra.mxu0 0.0
        %301 = vmatprep.subr.mxu0 0.0
        %302 = vmatpush1.msra.mxu0 0.0
        %303 = vmatprep.subr.mxu0 0.0
        %304 = vmatpush1.msra.mxu0 0.0
        %305 = vmatprep.subr.mxu0 0.0
        %306 = vmatpush1.msra.mxu0 0.0
        %307 = vmatprep.subr.mxu0 0.0
        %308 = vmatpush1.msra.mxu0 0.0
        %309 = vmatprep.subr.mxu0 0.0
        %310 = vmatpush1.msra.mxu0 0.0
        %311 = vmatprep.subr.mxu0 0.0
        %312 = vmatpush1.msra.mxu0 0.0
        %313 = vmatprep.subr.mxu0 0.0
        %314 = vmatpush1.msra.mxu0 0.0
        %315 = vmatprep.subr.mxu0 0.0
        %316 = vmatpush1.msra.mxu0 0.0
        %317 = vmatprep.subr.mxu0 0.0
        %318 = vmatpush1.msra.mxu0 0.0
        %319 = vmatprep.subr.mxu0 0.0
        %320 = vmatpush1.msra.mxu0 0.0
        %321 = vmatprep.subr.mxu0 0.0
        %322 = vmatpush1.msra.mxu0 0.0
        %323 = vmatprep.subr.mxu0 0.0
        %324 = vmatpush1.msra.mxu0 0.0
        %325 = vmatprep.subr.mxu0 0.0
        %326 = vmatpush1.msra.mxu0 0.0
        %327 = vmatprep.subr.mxu0 0.0
        %328 = vmatpush1.msra.mxu0 0.0
        %329 = vmatprep.subr.mxu0 0.0
        %330 = vmatpush1.msra.mxu0 0.0
        %331 = vmatprep.subr.mxu0 0.0
        %332 = vmatpush1.msra.mxu0 0.0
        %333 = vmatprep.subr.mxu0 0.0
        %334 = vmatpush1.msra.mxu0 0.0
        %335 = vmatprep.subr.mxu0 0.0
        %336 = vmatpush1.msra.mxu0 0.0
        %337 = vmatprep.subr.mxu0 0.0
        %338 = vmatpush1.msra.mxu0 0.0
        %339 = vmatprep.subr.mxu0 0.0
        %340 = vmatpush1.msra.mxu0 0.0
        %341 = vmatprep.subr.mxu0 0.0
        %342 = vmatpush1.msra.mxu0 0.0
        %343 = vmatprep.mubr.f32.mxu0 0.0
        %344 = vmatmul.mubr.f32.gmra.mrb[0].mxu0 %v265
        %v345 = vpop.f32.mrb[0].mxu0
        %v346 = vadd.f32 0.0, %v345
        %v347 = vpop.f32.mrb[0].mxu0
        %348 = vmatprep.mubr.f32.mxu0 0.0
        %349 = vmatmul.mubr.f32.gmra.mrb[0].mxu0 %v267
        %v350 = vpop.f32.mrb[0].mxu0
        %v351 = vadd.f32 0.0, %v350
        %v352 = vpop.f32.mrb[0].mxu0
        %353 = vmatprep.mubr.f32.mxu0 0.0
        %354 = vmatmul.mubr.f32.gmra.mrb[0].mxu0 %v269
        %v355 = vpop.f32.mrb[0].mxu0
        %v356 = vadd.f32 0.0, %v355
        %v357 = vpop.f32.mrb[0].mxu0
        %358 = vmatprep.mubr.f32.mxu0 0.0
        %359 = vmatmul.mubr.f32.gmra.mrb[0].mxu0 %v271
        %v360 = vpop.f32.mrb[0].mxu0
        %v361 = vadd.f32 0.0, %v360
        %v362 = vpop.f32.mrb[0].mxu0
        %363 = vmatprep.mubr.f32.mxu0 0.0
        %364 = vmatmul.mubr.f32.gmra.mrb[0].mxu0 %v273
        %v365 = vpop.f32.mrb[0].mxu0
        %v366 = vadd.f32 0.0, %v365
        %v367 = vpop.f32.mrb[0].mxu0
        %368 = vmatprep.mubr.f32.mxu0 0.0
        %369 = vmatmul.mubr.f32.gmra.mrb[0].mxu0 %v275
        %v370 = vpop.f32.mrb[0].mxu0
        %v371 = vadd.f32 0.0, %v370
        %v372 = vpop.f32.mrb[0].mxu0
        %373 = vmatprep.mubr.f32.mxu0 0.0
        %374 = vmatmul.mubr.f32.gmra.mrb[0].mxu0 %v277
        %v375 = vpop.f32.mrb[0].mxu0
        %v376 = vadd.f32 0.0, %v375
        %v377 = vpop.f32.mrb[0].mxu0
        %378 = vdwg.mxu0
        %386 = vrot.lane.b32.xlu0 %v346, 16
        %v387 = vpop.permute.xlu0 %386
        %388 = vrot.lane.b32.xlu0 %v351, 16
        %v389 = vpop.permute.xlu0 %388
        %390 = vrot.lane.b32.xlu0 %v356, 16
        %v391 = vpop.permute.xlu0 %390
        %392 = vrot.lane.b32.xlu0 %v361, 16
        %v393 = vpop.permute.xlu0 %392
        %394 = vrot.lane.b32.xlu0 %v366, 16
        %v395 = vpop.permute.xlu0 %394
        %396 = vrot.lane.b32.xlu0 %v371, 16
        %v397 = vpop.permute.xlu0 %396
        %398 = vrot.lane.b32.xlu0 %v376, 16
        %v399 = vpop.permute.xlu0 %398
        %v407 = vmul.f32 %v138, %v387
        %v408 = vmul.f32 %v139, %v389
        %v409 = vmul.f32 %v140, %v391
        %v410 = vmul.f32 %v141, %v393
        %v411 = vmul.f32 %v142, %v395
        %v412 = vmul.f32 %v143, %v397
        %v413 = vmul.f32 %v144, %v399
        %414 = vst.msk [vmem:[%s118] sm:$0xff] %vm264, %v194
        %415 = vst.msk [vmem:[%s118 + $0x8] sm:$0xff] %vm264, %v195
        %416 = vst.msk [vmem:[%s118 + $0x10] sm:$0xff] %vm264, %v196
        %417 = vst.msk [vmem:[%s118 + $0x18] sm:$0xff] %vm264, %v197
        %418 = vst.msk [vmem:[%s118 + $0x20] sm:$0xff] %vm264, %v198
        %419 = vst.msk [vmem:[%s118 + $0x28] sm:$0xff] %vm264, %v199
        %420 = vst.msk [vmem:[%s118 + $0x30] sm:$0xff] %vm264, %v200
        %428 = vrot.lane.b32.xlu0 %v407, 120
        %v429 = vpop.permute.xlu0 %428
        %430 = vrot.lane.b32.xlu0 %v408, 120
        %v431 = vpop.permute.xlu0 %430
        %432 = vrot.lane.b32.xlu0 %v409, 120
        %v433 = vpop.permute.xlu0 %432
        %434 = vrot.lane.b32.xlu0 %v410, 120
        %v435 = vpop.permute.xlu0 %434
        %436 = vrot.lane.b32.xlu0 %v411, 120
        %v437 = vpop.permute.xlu0 %436
        %438 = vrot.lane.b32.xlu0 %v412, 120
        %v439 = vpop.permute.xlu0 %438
        %440 = vrot.lane.b32.xlu0 %v413, 120
        %v441 = vpop.permute.xlu0 %440
        %vm449 = vcmask 326720
        %450 = vst.msk [vmem:[%s118] sm:$0xff] %vm449, %v429
        %451 = vst.msk [vmem:[%s118 + $0x8] sm:$0xff] %vm449, %v431
        %452 = vst.msk [vmem:[%s118 + $0x10] sm:$0xff] %vm449, %v433
        %453 = vst.msk [vmem:[%s118 + $0x18] sm:$0xff] %vm449, %v435
        %454 = vst.msk [vmem:[%s118 + $0x20] sm:$0xff] %vm449, %v437
        %455 = vst.msk [vmem:[%s118 + $0x28] sm:$0xff] %vm449, %v439
        %456 = vst.msk [vmem:[%s118 + $0x30] sm:$0xff] %vm449, %v441
        %s457 = sand.u32 %s46, 1
        %s458 = sand.u32 %s46, 1
        %s459 = smul.addr %s458, 56
        %s460 = scalar_lea.vmem [#allocation2], %s459
        // Predicated region
        $region25: #{tpu_custom_call.1} parent=23 // pred_check
          %p461 = pneg %p56
        $region26: #{tpu_custom_call.1} parent=23 // pred_check_branch
          %463 = sbr.rel (%p461) target = $region28
        $region27: #{tpu_custom_call.1} parent=23 // pred_region
          %s464 = smul.u32 7, %s12
          %s465 = ssub.s32 25, %s464
          %p466 = scmp.lt.s32.totalorder %s465, 7
          %s467 = scalar_select %p466, %s465, 7
          %s468 = smul.u32 128, %s467
          %p469 = scmp.ne.s32.totalorder 0, %s468
          %s470 = smul.addr %s464, 8
          %s471 = scalar_lea.vmem %s1, %s470
          // Predicated region
          $region29: #{tpu_custom_call.1} parent=27 // pred_check
            %p472 = pneg %p469
          $region30: #{tpu_custom_call.1} parent=27 // pred_check_branch
            %474 = sbr.rel (%p472) target = $region32
          $region31: #{tpu_custom_call.1} parent=27 // pred_region
            // Predicated region
            $region33: #{tpu_custom_call.1} parent=31 // pred_check
              _
            $region34: #{tpu_custom_call.1} parent=31 // pred_check_branch
              %476 = sbr.rel (0) target = $region36
            $region35: #{tpu_custom_call.1} parent=31 // pred_region
              // Predicated region
              $region55: #{tpu_custom_call.1} parent=35 // pred_check
                _
              $region56: #{tpu_custom_call.1} parent=35 // pred_check_branch
                %538 = sbr.rel (0) target = $region58
              $region57: #{tpu_custom_call.1} parent=35 // pred_region
                %s539 = sdiv.u32.pop %s467, 7
                %s540 = srem.u32.pop %s467, 7
                // While loop
                $region59: #{tpu_custom_call.1} parent=57 // loop_pre_header
                  _
                $region60: #{tpu_custom_call.1} parent=57 // loop_header
                  %s542 = sphi 0, %s544
                  %p543 = scmp.ge.s32.totalorder %s542, %s539
                  %s547 = sphi 0, %s566
                  %s548 = sphi %s460, %s569
                  %s549 = sphi %s471, %s570
                $region61: #{tpu_custom_call.1} parent=57 // loop_header_branch
                  %546 = sbr.rel (%p543) target = $region65
                $region62: #{tpu_custom_call.1} parent=57 // loop_body
                  %v550 = vld [vmem:[%s548] sm:$0xff]
                  %551 = vst [vmem:[%s549] sm:$0xff] %v550
                  %v552 = vld [vmem:[%s548 + $0x8] sm:$0xff]
                  %553 = vst [vmem:[%s549 + $0x8] sm:$0xff] %v552
                  %v554 = vld [vmem:[%s548 + $0x10] sm:$0xff]
                  %555 = vst [vmem:[%s549 + $0x10] sm:$0xff] %v554
                  %v556 = vld [vmem:[%s548 + $0x18] sm:$0xff]
                  %557 = vst [vmem:[%s549 + $0x18] sm:$0xff] %v556
                  %v558 = vld [vmem:[%s548 + $0x20] sm:$0xff]
                  %559 = vst [vmem:[%s549 + $0x20] sm:$0xff] %v558
                  %v560 = vld [vmem:[%s548 + $0x28] sm:$0xff]
                  %561 = vst [vmem:[%s549 + $0x28] sm:$0xff] %v560
                  %v562 = vld [vmem:[%s548 + $0x30] sm:$0xff]
                  %563 = vst [vmem:[%s549 + $0x30] sm:$0xff] %v562
                  %s564 = sadd.s32 1, %s547
                  %p565 = scmp.ge.s32.totalorder %s564, %s539
                  %s566 = scalar_select %p565, 0, %s564
                  %s567 = smul.u32 %s566, 56
                  %s568 = smul.u32 %s566, 56
                  %s569 = scalar_lea.vmem %s460, %s567 [#allocation2]
                  %s570 = scalar_lea.vmem %s471, %s568
                $region63: #{tpu_custom_call.1} parent=57 // loop_footer
                  %s544 = sadd.s32 %s542, 1
                $region64: #{tpu_custom_call.1} parent=57 // loop_footer_branch
                  %541 = sbr.rel target = $region60
                $region65: #{tpu_custom_call.1} parent=57 // loop_exit
                  _
                %s571 = sdiv.u32.pop %s467, 7
                %s572 = srem.u32.pop %s467, 7
                %s573 = smul.u32 %s571, 7
                %s574 = smul.u32 8, %s573
                %s575 = scalar_lea.vmem %s460, %s574 [#allocation2]
                %s576 = smul.u32 8, %s573
                %s577 = scalar_lea.vmem %s471, %s576
                // While loop
                $region66: #{tpu_custom_call.1} parent=57 // loop_pre_header
                  _
                $region67: #{tpu_custom_call.1} parent=57 // loop_header
                  %s579 = sphi 0, %s581
                  %p580 = scmp.ge.s32.totalorder %s579, %s572
                  %s584 = sphi 0, %s591
                  %s585 = sphi %s575, %s594
                  %s586 = sphi %s577, %s595
                $region68: #{tpu_custom_call.1} parent=57 // loop_header_branch
                  %583 = sbr.rel (%p580) target = $region72
                $region69: #{tpu_custom_call.1} parent=57 // loop_body
                  %v587 = vld [vmem:[%s585] sm:$0xff]
                  %588 = vst [vmem:[%s586] sm:$0xff] %v587
                  %s589 = sadd.s32 1, %s584
                  %p590 = scmp.ge.s32.totalorder %s589, %s572
                  %s591 = scalar_select %p590, 0, %s589
                  %s592 = smul.u32 %s591, 8
                  %s593 = smul.u32 %s591, 8
                  %s594 = scalar_lea.vmem %s575, %s592 [#allocation2]
                  %s595 = scalar_lea.vmem %s577, %s593
                $region70: #{tpu_custom_call.1} parent=57 // loop_footer
                  %s581 = sadd.s32 %s579, 1
                $region71: #{tpu_custom_call.1} parent=57 // loop_footer_branch
                  %578 = sbr.rel target = $region67
                $region72: #{tpu_custom_call.1} parent=57 // loop_exit
                  _
              $region58: #{tpu_custom_call.1} parent=35 // pred_fallthru
                _
              // Predicated region
              $region73: #{tpu_custom_call.1} parent=35 // pred_check
                _
              $region74: #{tpu_custom_call.1} parent=35 // pred_check_branch
                %597 = sbr.rel target = $region76
              $region75: #{tpu_custom_call.1} parent=35 // pred_region
                _
              $region76: #{tpu_custom_call.1} parent=35 // pred_fallthru
                _
            $region36: #{tpu_custom_call.1} parent=31 // pred_fallthru
              _
            // Predicated region
            $region37: #{tpu_custom_call.1} parent=31 // pred_check
              _
            $region38: #{tpu_custom_call.1} parent=31 // pred_check_branch
              %478 = sbr.rel target = $region40
            $region39: #{tpu_custom_call.1} parent=31 // pred_region
              %s480 = sdiv.u32.pop %s467, 7
              %s481 = srem.u32.pop %s467, 7
              // While loop
              $region41: #{tpu_custom_call.1} parent=39 // loop_pre_header
                _
              $region42: #{tpu_custom_call.1} parent=39 // loop_header
                %s483 = sphi 0, %s485
                %p484 = scmp.ge.s32.totalorder %s483, %s480
                %s488 = sphi 0, %s507
                %s489 = sphi %s460, %s510
                %s490 = sphi %s471, %s511
              $region43: #{tpu_custom_call.1} parent=39 // loop_header_branch
                %487 = sbr.rel (%p484) target = $region47
              $region44: #{tpu_custom_call.1} parent=39 // loop_body
                %v491 = vld [vmem:[%s489] sm:$0xff]
                %492 = vst [vmem:[%s490] sm:$0xff] %v491
                %v493 = vld [vmem:[%s489 + $0x8] sm:$0xff]
                %494 = vst [vmem:[%s490 + $0x8] sm:$0xff] %v493
                %v495 = vld [vmem:[%s489 + $0x10] sm:$0xff]
                %496 = vst [vmem:[%s490 + $0x10] sm:$0xff] %v495
                %v497 = vld [vmem:[%s489 + $0x18] sm:$0xff]
                %498 = vst [vmem:[%s490 + $0x18] sm:$0xff] %v497
                %v499 = vld [vmem:[%s489 + $0x20] sm:$0xff]
                %500 = vst [vmem:[%s490 + $0x20] sm:$0xff] %v499
                %v501 = vld [vmem:[%s489 + $0x28] sm:$0xff]
                %502 = vst [vmem:[%s490 + $0x28] sm:$0xff] %v501
                %v503 = vld [vmem:[%s489 + $0x30] sm:$0xff]
                %504 = vst [vmem:[%s490 + $0x30] sm:$0xff] %v503
                %s505 = sadd.s32 1, %s488
                %p506 = scmp.ge.s32.totalorder %s505, %s480
                %s507 = scalar_select %p506, 0, %s505
                %s508 = smul.u32 %s507, 56
                %s509 = smul.u32 %s507, 56
                %s510 = scalar_lea.vmem %s460, %s508 [#allocation2]
                %s511 = scalar_lea.vmem %s471, %s509
              $region45: #{tpu_custom_call.1} parent=39 // loop_footer
                %s485 = sadd.s32 %s483, 1
              $region46: #{tpu_custom_call.1} parent=39 // loop_footer_branch
                %482 = sbr.rel target = $region42
              $region47: #{tpu_custom_call.1} parent=39 // loop_exit
                _
              %s512 = sdiv.u32.pop %s467, 7
              %s513 = srem.u32.pop %s467, 7
              %s514 = smul.u32 %s512, 7
              %s515 = smul.u32 8, %s514
              %s516 = scalar_lea.vmem %s460, %s515 [#allocation2]
              %s517 = smul.u32 8, %s514
              %s518 = scalar_lea.vmem %s471, %s517
              // While loop
              $region48: #{tpu_custom_call.1} parent=39 // loop_pre_header
                _
              $region49: #{tpu_custom_call.1} parent=39 // loop_header
                %s520 = sphi 0, %s522
                %p521 = scmp.ge.s32.totalorder %s520, %s513
                %s525 = sphi 0, %s532
                %s526 = sphi %s516, %s535
                %s527 = sphi %s518, %s536
              $region50: #{tpu_custom_call.1} parent=39 // loop_header_branch
                %524 = sbr.rel (%p521) target = $region54
              $region51: #{tpu_custom_call.1} parent=39 // loop_body
                %v528 = vld [vmem:[%s526] sm:$0xff]
                %529 = vst [vmem:[%s527] sm:$0xff] %v528
                %s530 = sadd.s32 1, %s525
                %p531 = scmp.ge.s32.totalorder %s530, %s513
                %s532 = scalar_select %p531, 0, %s530
                %s533 = smul.u32 %s532, 8
                %s534 = smul.u32 %s532, 8
                %s535 = scalar_lea.vmem %s516, %s533 [#allocation2]
                %s536 = scalar_lea.vmem %s518, %s534
              $region52: #{tpu_custom_call.1} parent=39 // loop_footer
                %s522 = sadd.s32 %s520, 1
              $region53: #{tpu_custom_call.1} parent=39 // loop_footer_branch
                %519 = sbr.rel target = $region49
              $region54: #{tpu_custom_call.1} parent=39 // loop_exit
                _
            $region40: #{tpu_custom_call.1} parent=31 // pred_fallthru
              _
          $region32: #{tpu_custom_call.1} parent=27 // pred_fallthru
            _
          %598 = vnop
        $region28: #{tpu_custom_call.1} parent=23 // pred_fallthru
          _
      $region24: #{tpu_custom_call.1} parent=5 // pred_fallthru
        _
      %p599 = scmp.le.s32.totalorder 2, %s7
      // Predicated region
      $region77: #{tpu_custom_call.1} parent=5 // pred_check
        %p600 = pneg %p599
      $region78: #{tpu_custom_call.1} parent=5 // pred_check_branch
        %602 = sbr.rel (%p600) target = $region80
      $region79: #{tpu_custom_call.1} parent=5 // pred_region
        %s603 = ssub.s32 %s7, 2
        // Predicated region
        $region81: #{tpu_custom_call.1} parent=79 // pred_check
          %p604 = pneg %p62
        $region82: #{tpu_custom_call.1} parent=79 // pred_check_branch
          %606 = sbr.rel (%p604) target = $region84
        $region83: #{tpu_custom_call.1} parent=79 // pred_region
          %s607 = sand.u32 %s47, 1
          %s608 = sand.u32 %s47, 1
          %s609 = smul.addr %s608, 56
          %s610 = scalar_lea.vmem [#allocation2], %s609
        $region84: #{tpu_custom_call.1} parent=79 // pred_fallthru
          _
      $region80: #{tpu_custom_call.1} parent=5 // pred_fallthru
        _
    $region6: #{tpu_custom_call.1} parent=1 // loop_footer
      %s11 = sadd.s32 1, %s7
    $region7: #{tpu_custom_call.1} parent=1 // loop_footer_branch
      %6 = sbr.rel target = $region3
    $region8: #{tpu_custom_call.1} parent=1 // loop_exit
      _

</llo_original>
